<compile_context>
chip_gen: v5e
topology: v5e:2x2
jax: 0.10.0
libtpu: 0.0.40
codegen_flags: <defaults>
</compile_context>

<pallas_src>
import functools

import jax
import jax.numpy as jnp
from jax.experimental import pallas as pl
from jax.experimental.pallas import tpu as pltpu


def mutan_kernel(lhs_ref, w_ref, b_ref, out_ref, *, num_layers, out_pad, out_dim):
    # TODO(synk): Dropout(p=0.5) is omitted (eval-mode identity); add stateful
    # pltpu.prng_* masking here if training-mode dropout is ever needed.

    # Single block-diagonal matmul covering both modalities:
    #   (B, Dv+Dq) @ (Dv+Dq, 2*L*OP) -> (B, 2*L*OP), f32 accumulation.
    scores = (
        jnp.dot(lhs_ref[...], w_ref[...], preferred_element_type=jnp.float32)
        + b_ref[...]
    )
    act = jnp.tanh(scores)                        # one fused EUP tanh stream

    half = num_layers * out_pad                   # 128-lane-aligned split point
    prod = act[:, :half] * act[:, half:]          # (B, L*OP) = tanh(hv)*tanh(hq)

    # Unrolled, vreg-aligned sum over the L layer blocks (each OP lanes wide).
    acc = prod[:, 0:out_pad]
    for l in range(1, num_layers):
        acc = acc + prod[:, l * out_pad:(l + 1) * out_pad]

    # Padded lanes of acc are exactly 0; drop them via the (B, out_dim) store.
    out_ref[...] = jnp.tanh(acc)[:, :out_dim].astype(out_ref.dtype)


def prepare_mutan_params(wv, bv, wq, bq):
    """One-time parameter fusion (NOT in the per-call hot path).

    wv: (L, Dv, O), bv: (L, 1, O) or (L, O), wq: (L, Dq, O), bq: like bv.
    Returns (w_fused, b_fused, static_dims):
      w_fused: (Dv+Dq, 2*L*OP) block-diagonal, layer-major, O padded to OP.
      b_fused: (1, 2*L*OP) matching bias row.
    """
    L, Dv, O = wv.shape
    _, Dq, _ = wq.shape
    OP = ((O + 127) // 128) * 128          # pad each layer block to vreg width

    def pack(w, b, d_in):
        w_p = jnp.pad(w, ((0, 0), (0, 0), (0, OP - O)))            # (L, d, OP)
        w_f = jnp.transpose(w_p, (1, 0, 2)).reshape(d_in, L * OP)  # layer-major
        b_p = jnp.pad(b.reshape(L, O), ((0, 0), (0, OP - O)))      # (L, OP)
        return w_f, b_p.reshape(1, L * OP)

    wv_f, bv_f = pack(wv, bv, Dv)
    wq_f, bq_f = pack(wq, bq, Dq)

    w_fused = jnp.zeros((Dv + Dq, 2 * L * OP), dtype=wv.dtype)
    w_fused = w_fused.at[:Dv, :L * OP].set(wv_f)
    w_fused = w_fused.at[Dv:, L * OP:].set(wq_f)
    b_fused = jnp.concatenate([bv_f, bq_f], axis=1)

    dims = dict(num_layers=L, out_dim=O, out_pad=OP)
    return w_fused, b_fused, dims


def mutan_fusion(img_emb, ques_emb, w_fused, b_fused, *, num_layers, out_dim,
                 out_pad):
    """Hot path: one activation concat + one single-grid-point pallas_call."""
    B = img_emb.shape[0]
    lhs = jnp.concatenate([img_emb, ques_emb], axis=1)     # (B, Dv+Dq)
    K = lhs.shape[1]
    N = 2 * num_layers * out_pad

    kernel = functools.partial(
        mutan_kernel, num_layers=num_layers, out_pad=out_pad, out_dim=out_dim)

    itemsize = jnp.dtype(img_emb.dtype).itemsize
    cost = pl.CostEstimate(
        flops=2 * B * K * N,
        transcendentals=B * N + B * out_pad,
        bytes_accessed=int(lhs.size + w_fused.size + b_fused.size + B * out_dim)
        * itemsize,
    )

    return pl.pallas_call(
        kernel,
        out_shape=jax.ShapeDtypeStruct((B, out_dim), img_emb.dtype),
        in_specs=[pl.BlockSpec(memory_space=pltpu.MemorySpace.VMEM)
                  for _ in range(3)],
        out_specs=pl.BlockSpec(memory_space=pltpu.MemorySpace.VMEM),
        cost_estimate=cost,
    )(lhs, w_fused, b_fused)


def mutan_fusion_ref(img_emb, ques_emb, wv, bv, wq, bq):
    """Pure-JAX reference (mirrors the PyTorch forward in eval mode)."""
    x_hv = jnp.tanh(jnp.einsum("bd,ldo->lbo", img_emb, wv) + bv)   # (L,B,O)
    x_hq = jnp.tanh(jnp.einsum("bd,ldo->lbo", ques_emb, wq) + bq)  # (L,B,O)
    return jnp.tanh((x_hq * x_hv).sum(axis=0))


if __name__ == "__main__":
    # Small shapes consistent with the module: video_dim=32, data_dim=48,
    # out_dim=64, num_layers=5, batch=8.
    B, Dv, Dq, O, L = 8, 32, 48, 64, 5

    key = jax.random.PRNGKey(0)
    k_img, k_ques, k_wv, k_bv, k_wq, k_bq = jax.random.split(key, 6)

    img_emb = jax.random.normal(k_img, (B, Dv), dtype=jnp.float32)
    ques_emb = jax.random.normal(k_ques, (B, Dq), dtype=jnp.float32)

    # Deterministic parameter init (synthetic; shapes follow nn.Linear, stored
    # pre-transposed to (L, in_dim, out_dim) for a clean x @ W convention).
    wv = jax.random.normal(k_wv, (L, Dv, O), dtype=jnp.float32) * (1.0 / Dv ** 0.5)
    bv = jax.random.normal(k_bv, (L, 1, O), dtype=jnp.float32) * 0.1
    wq = jax.random.normal(k_wq, (L, Dq, O), dtype=jnp.float32) * (1.0 / Dq ** 0.5)
    bq = jax.random.normal(k_bq, (L, 1, O), dtype=jnp.float32) * 0.1

    # One-time parameter setup (hoisted out of the per-call path).
    w_fused, b_fused, dims = prepare_mutan_params(wv, bv, wq, bq)
    w_fused, b_fused = jax.block_until_ready((w_fused, b_fused))

    out = mutan_fusion(img_emb, ques_emb, w_fused, b_fused, **dims)
    out = jax.block_until_ready(out)

    ref = mutan_fusion_ref(img_emb, ques_emb, wv, bv, wq, bq)
    assert out.shape == (B, O)
    assert jnp.allclose(out, ref, atol=1e-5, rtol=1e-5), "mismatch vs reference"

    print("KERNEL_OK")
</pallas_src>

<mosaic_0001>
module attributes {stable_mosaic.version = 11 : i64} {
  func.func @mutan_kernel(%arg0: memref<8x80xf32, #tpu.memory_space<vmem>>, %arg1: memref<80x1280xf32, #tpu.memory_space<vmem>>, %arg2: memref<1x1280xf32, #tpu.memory_space<vmem>>, %arg3: memref<8x64xf32, #tpu.memory_space<vmem>>) attributes {dimension_semantics = [], scalar_prefetch = 0 : i64, scratch_operands = 0 : i64, tpu.core_type = #tpu.core_type<tc>} {
    %c0 = arith.constant 0 : index
    %c0_0 = arith.constant 0 : index
    %0 = vector.load %arg0[%c0, %c0_0] : memref<8x80xf32, #tpu.memory_space<vmem>>, vector<8x80xf32>
    %c0_1 = arith.constant 0 : index
    %c0_2 = arith.constant 0 : index
    %1 = vector.load %arg1[%c0_1, %c0_2] : memref<80x1280xf32, #tpu.memory_space<vmem>>, vector<80x1280xf32>
    %cst = arith.constant dense<0.000000e+00> : vector<8x1280xf32>
    %2 = tpu.matmul %0, %1, %cst {dimension_numbers = #tpu.dot_dimension_numbers<[1], [0], [0], [1], [0, 0, 1, 1], [], []>} : vector<8x80xf32>, vector<80x1280xf32>, vector<8x1280xf32> -> vector<8x1280xf32>
    %c0_3 = arith.constant 0 : index
    %c0_4 = arith.constant 0 : index
    %3 = vector.load %arg2[%c0_3, %c0_4] : memref<1x1280xf32, #tpu.memory_space<vmem>>, vector<1x1280xf32>
    %4 = vector.broadcast %3 : vector<1x1280xf32> to vector<8x1280xf32>
    %5 = arith.addf %2, %4 : vector<8x1280xf32>
    %6 = math.tanh %5 : vector<8x1280xf32>
    %7 = vector.extract_strided_slice %6 {offsets = [0, 0], sizes = [8, 640], strides = [1, 1]} : vector<8x1280xf32> to vector<8x640xf32>
    %8 = vector.extract_strided_slice %6 {offsets = [0, 640], sizes = [8, 640], strides = [1, 1]} : vector<8x1280xf32> to vector<8x640xf32>
    %9 = arith.mulf %7, %8 : vector<8x640xf32>
    %10 = vector.extract_strided_slice %9 {offsets = [0, 0], sizes = [8, 128], strides = [1, 1]} : vector<8x640xf32> to vector<8x128xf32>
    %11 = vector.extract_strided_slice %9 {offsets = [0, 128], sizes = [8, 128], strides = [1, 1]} : vector<8x640xf32> to vector<8x128xf32>
    %12 = arith.addf %10, %11 : vector<8x128xf32>
    %13 = vector.extract_strided_slice %9 {offsets = [0, 256], sizes = [8, 128], strides = [1, 1]} : vector<8x640xf32> to vector<8x128xf32>
    %14 = arith.addf %12, %13 : vector<8x128xf32>
    %15 = vector.extract_strided_slice %9 {offsets = [0, 384], sizes = [8, 128], strides = [1, 1]} : vector<8x640xf32> to vector<8x128xf32>
    %16 = arith.addf %14, %15 : vector<8x128xf32>
    %17 = vector.extract_strided_slice %9 {offsets = [0, 512], sizes = [8, 128], strides = [1, 1]} : vector<8x640xf32> to vector<8x128xf32>
    %18 = arith.addf %16, %17 : vector<8x128xf32>
    %19 = math.tanh %18 : vector<8x128xf32>
    %20 = vector.extract_strided_slice %19 {offsets = [0, 0], sizes = [8, 64], strides = [1, 1]} : vector<8x128xf32> to vector<8x64xf32>
    %c0_5 = arith.constant 0 : index
    %c0_6 = arith.constant 0 : index
    %21 = vector.load %arg3[%c0_5, %c0_6] : memref<8x64xf32, #tpu.memory_space<vmem>>, vector<8x64xf32>
    tpu.vector_store %arg3[%c0_5, %c0_6], %20 {strides = array<i32>} : memref<8x64xf32, #tpu.memory_space<vmem>>, vector<8x64xf32>,
    return
  }
}

</mosaic_0001>

<llo_original>
// kernel: tpu_custom_call.1
$region0: #{tpu_custom_call.1}
  #allocation0 [shape = 'u32[]', space=smem, size = 0x4, offset = 0x4, fixed_abs, tag = 'smem constant byte address 0x4 - core index']
  #allocation1 [shape = 'u32[72,128]{1,0:T(1,128)}', space=vmem, size = 0x9000, scoped, tag = 'internal scratch']
  %s0 = inlined_call_operand.hbm [shape: f32[8,80], index: 0, kind: input, shape index: {}]
  %s1 = inlined_call_operand.hbm [shape: f32[80,1280], index: 1, kind: input, shape index: {}]
  %s2 = inlined_call_operand.hbm [shape: f32[1,1280], index: 2, kind: input, shape index: {}]
  %s3 = inlined_call_operand.hbm [shape: f32[8,64], index: 3, kind: output, shape index: {}]
  %s4 = sld [smem:[#allocation0]]
  $region34: #{tpu_custom_call.1} parent=0
    _
  %s6 = ssub.s32 1, %s4
  %s7 = scalar_select 0, %s6, %s4
  $region1: #{tpu_custom_call.1} parent=0
    #allocation2 [shape = 'u8[4096]{0}', space=vmem, size = 0x1000, scoped, tag = 'input window, operand 0, single buffered']
    #allocation3 [shape = 's32[1]{0}', space=sflag, size = 0x4, scoped, tag = 'scoped memory for tpu_custom_call.1']
    #allocation4 [shape = 's32[1]{0}', space=sflag, size = 0x4, scoped, tag = 'scoped memory for tpu_custom_call.1']
    #allocation5 [shape = 'u8[409600]{0}', space=vmem, size = 0x64000, scoped, tag = 'input window, operand 1, single buffered']
    #allocation6 [shape = 's32[1]{0}', space=sflag, size = 0x4, scoped, tag = 'scoped memory for tpu_custom_call.1']
    #allocation7 [shape = 'u8[5120]{0}', space=vmem, size = 0x1400, scoped, tag = 'input window, operand 2, single buffered']
    #allocation8 [shape = 'u8[4096]{0}', space=vmem, size = 0x1000, scoped, tag = 'output window, operand 0, single buffered']
    %8 = vsyncpa [#allocation3], 0
    %9 = vsyncpa [#allocation6], 0
    %10 = vsyncpa [#allocation4], 0
    // Predicated region
    $region2: #{tpu_custom_call.1} parent=1 // pred_check
      _
    $region3: #{tpu_custom_call.1} parent=1 // pred_check_branch
      %12 = sbr.rel (0) target = $region5
    $region4: #{tpu_custom_call.1} parent=1 // pred_region
      %14 = vsyncadd [#allocation3], 0
      %s16 = sshll.u32 %s0, 4
      %s17 = int_to_ptr.hbm [resolvable:$true] %s16
      %s18 = sshll.u32 [#allocation2], 4
      %s19 = int_to_ptr.vmem [resolvable:$true] %s18
      %21 = dma.hbm_to_vmem [thread:$0]  %s17, 128, %s19, [#allocation3]
    $region5: #{tpu_custom_call.1} parent=1 // pred_fallthru
      _
    // Predicated region
    $region6: #{tpu_custom_call.1} parent=1 // pred_check
      _
    $region7: #{tpu_custom_call.1} parent=1 // pred_check_branch
      %23 = sbr.rel (0) target = $region9
    $region8: #{tpu_custom_call.1} parent=1 // pred_region
      %25 = vsyncadd [#allocation6], 0
      %s26 = sshll.u32 %s1, 4
      %s27 = int_to_ptr.hbm [resolvable:$true] %s26
      %s28 = sshll.u32 [#allocation5], 4
      %s29 = int_to_ptr.vmem [resolvable:$true] %s28
      %34 = dma.hbm_to_vmem [thread:$0]  %s27, 12800, %s29, [#allocation6], 1280, 1280, 80
    $region9: #{tpu_custom_call.1} parent=1 // pred_fallthru
      _
    // Predicated region
    $region10: #{tpu_custom_call.1} parent=1 // pred_check
      _
    $region11: #{tpu_custom_call.1} parent=1 // pred_check_branch
      %36 = sbr.rel (0) target = $region13
    $region12: #{tpu_custom_call.1} parent=1 // pred_region
      %38 = vsyncadd [#allocation6], 0
      %s40 = sshll.u32 %s2, 4
      %s41 = int_to_ptr.hbm [resolvable:$true] %s40
      %s42 = sshll.u32 [#allocation7], 4
      %s43 = int_to_ptr.vmem [resolvable:$true] %s42
      %45 = dma.hbm_to_vmem [thread:$0]  %s41, 160, %s43, [#allocation6]
    $region13: #{tpu_custom_call.1} parent=1 // pred_fallthru
      _
    // Predicated region
    $region14: #{tpu_custom_call.1} parent=1 // pred_check
      _
    $region15: #{tpu_custom_call.1} parent=1 // pred_check_branch
      %47 = sbr.rel (0) target = $region17
    $region16: #{tpu_custom_call.1} parent=1 // pred_region
      %49 = dma.done [#allocation3], 128
    $region17: #{tpu_custom_call.1} parent=1 // pred_fallthru
      _
    // Predicated region
    $region18: #{tpu_custom_call.1} parent=1 // pred_check
      _
    $region19: #{tpu_custom_call.1} parent=1 // pred_check_branch
      %51 = sbr.rel (0) target = $region21
    $region20: #{tpu_custom_call.1} parent=1 // pred_region
      %53 = dma.done [#allocation6], 12800
    $region21: #{tpu_custom_call.1} parent=1 // pred_fallthru
      _
    // Predicated region
    $region22: #{tpu_custom_call.1} parent=1 // pred_check
      _
    $region23: #{tpu_custom_call.1} parent=1 // pred_check_branch
      %55 = sbr.rel (0) target = $region25
    $region24: #{tpu_custom_call.1} parent=1 // pred_region
      %57 = dma.done [#allocation6], 160
    $region25: #{tpu_custom_call.1} parent=1 // pred_fallthru
      _
    %v58 = vld [vmem:[#allocation2] sm:$0xff]
    %v59 = vld [vmem:[#allocation5] sm:$0xff]
    %v60 = vld [vmem:[#allocation5 + $0x8] sm:$0xff]
    %v61 = vld [vmem:[#allocation5 + $0x10] sm:$0xff]
    %v62 = vld [vmem:[#allocation5 + $0x18] sm:$0xff]
    %v63 = vld [vmem:[#allocation5 + $0x20] sm:$0xff]
    %v64 = vld [vmem:[#allocation5 + $0x28] sm:$0xff]
    %v65 = vld [vmem:[#allocation5 + $0x30] sm:$0xff]
    %v66 = vld [vmem:[#allocation5 + $0x38] sm:$0xff]
    %v67 = vld [vmem:[#allocation5 + $0x40] sm:$0xff]
    %v68 = vld [vmem:[#allocation5 + $0x48] sm:$0xff]
    %v69 = vld [vmem:[#allocation5 + $0x50] sm:$0xff]
    %v70 = vld [vmem:[#allocation5 + $0x58] sm:$0xff]
    %v71 = vld [vmem:[#allocation5 + $0x60] sm:$0xff]
    %v72 = vld [vmem:[#allocation5 + $0x68] sm:$0xff]
    %v73 = vld [vmem:[#allocation5 + $0x70] sm:$0xff]
    %v74 = vld [vmem:[#allocation5 + $0x78] sm:$0xff]
    %v75 = vld [vmem:[#allocation5 + $0x80] sm:$0xff]
    %v76 = vld [vmem:[#allocation5 + $0x88] sm:$0xff]
    %v77 = vld [vmem:[#allocation5 + $0x90] sm:$0xff]
    %v78 = vld [vmem:[#allocation5 + $0x98] sm:$0xff]
    %v79 = vld [vmem:[#allocation5 + $0xa0] sm:$0xff]
    %v80 = vld [vmem:[#allocation5 + $0xa8] sm:$0xff]
    %v81 = vld [vmem:[#allocation5 + $0xb0] sm:$0xff]
    %v82 = vld [vmem:[#allocation5 + $0xb8] sm:$0xff]
    %v83 = vld [vmem:[#allocation5 + $0xc0] sm:$0xff]
    %v84 = vld [vmem:[#allocation5 + $0xc8] sm:$0xff]
    %v85 = vld [vmem:[#allocation5 + $0xd0] sm:$0xff]
    %v86 = vld [vmem:[#allocation5 + $0xd8] sm:$0xff]
    %v87 = vld [vmem:[#allocation5 + $0xe0] sm:$0xff]
    %v88 = vld [vmem:[#allocation5 + $0xe8] sm:$0xff]
    %v89 = vld [vmem:[#allocation5 + $0xf0] sm:$0xff]
    %v90 = vld [vmem:[#allocation5 + $0xf8] sm:$0xff]
    %v91 = vld [vmem:[#allocation5 + $0x100] sm:$0xff]
    %v92 = vld [vmem:[#allocation5 + $0x108] sm:$0xff]
    %v93 = vld [vmem:[#allocation5 + $0x110] sm:$0xff]
    %v94 = vld [vmem:[#allocation5 + $0x118] sm:$0xff]
    %v95 = vld [vmem:[#allocation5 + $0x120] sm:$0xff]
    %v96 = vld [vmem:[#allocation5 + $0x128] sm:$0xff]
    %v97 = vld [vmem:[#allocation5 + $0x130] sm:$0xff]
    %v98 = vld [vmem:[#allocation5 + $0x138] sm:$0xff]
    %v99 = vld [vmem:[#allocation5 + $0x140] sm:$0xff]
    %v100 = vld [vmem:[#allocation5 + $0x148] sm:$0xff]
    %v101 = vld [vmem:[#allocation5 + $0x150] sm:$0xff]
    %v102 = vld [vmem:[#allocation5 + $0x158] sm:$0xff]
    %v103 = vld [vmem:[#allocation5 + $0x160] sm:$0xff]
    %v104 = vld [vmem:[#allocation5 + $0x168] sm:$0xff]
    %v105 = vld [vmem:[#allocation5 + $0x170] sm:$0xff]
    %v106 = vld [vmem:[#allocation5 + $0x178] sm:$0xff]
    %v107 = vld [vmem:[#allocation5 + $0x180] sm:$0xff]
    %v108 = vld [vmem:[#allocation5 + $0x188] sm:$0xff]
    %v109 = vld [vmem:[#allocation5 + $0x190] sm:$0xff]
    %v110 = vld [vmem:[#allocation5 + $0x198] sm:$0xff]
    %v111 = vld [vmem:[#allocation5 + $0x1a0] sm:$0xff]
    %v112 = vld [vmem:[#allocation5 + $0x1a8] sm:$0xff]
    %v113 = vld [vmem:[#allocation5 + $0x1b0] sm:$0xff]
    %v114 = vld [vmem:[#allocation5 + $0x1b8] sm:$0xff]
    %v115 = vld [vmem:[#allocation5 + $0x1c0] sm:$0xff]
    %v116 = vld [vmem:[#allocation5 + $0x1c8] sm:$0xff]
    %v117 = vld [vmem:[#allocation5 + $0x1d0] sm:$0xff]
    %v118 = vld [vmem:[#allocation5 + $0x1d8] sm:$0xff]
    %v119 = vld [vmem:[#allocation5 + $0x1e0] sm:$0xff]
    %v120 = vld [vmem:[#allocation5 + $0x1e8] sm:$0xff]
    %v121 = vld [vmem:[#allocation5 + $0x1f0] sm:$0xff]
    %v122 = vld [vmem:[#allocation5 + $0x1f8] sm:$0xff]
    %v123 = vld [vmem:[#allocation5 + $0x200] sm:$0xff]
    %v124 = vld [vmem:[#allocation5 + $0x208] sm:$0xff]
    %v125 = vld [vmem:[#allocation5 + $0x210] sm:$0xff]
    %v126 = vld [vmem:[#allocation5 + $0x218] sm:$0xff]
    %v127 = vld [vmem:[#allocation5 + $0x220] sm:$0xff]
    %v128 = vld [vmem:[#allocation5 + $0x228] sm:$0xff]
    %v129 = vld [vmem:[#allocation5 + $0x230] sm:$0xff]
    %v130 = vld [vmem:[#allocation5 + $0x238] sm:$0xff]
    %v131 = vld [vmem:[#allocation5 + $0x240] sm:$0xff]
    %v132 = vld [vmem:[#allocation5 + $0x248] sm:$0xff]
    %v133 = vld [vmem:[#allocation5 + $0x250] sm:$0xff]
    %v134 = vld [vmem:[#allocation5 + $0x258] sm:$0xff]
    %v135 = vld [vmem:[#allocation5 + $0x260] sm:$0xff]
    %v136 = vld [vmem:[#allocation5 + $0x268] sm:$0xff]
    %v137 = vld [vmem:[#allocation5 + $0x270] sm:$0xff]
    %v138 = vld [vmem:[#allocation5 + $0x278] sm:$0xff]
    %v139 = vld [vmem:[#allocation5 + $0x280] sm:$0xff]
    %v140 = vld [vmem:[#allocation5 + $0x288] sm:$0xff]
    %v141 = vld [vmem:[#allocation5 + $0x290] sm:$0xff]
    %v142 = vld [vmem:[#allocation5 + $0x298] sm:$0xff]
    %v143 = vld [vmem:[#allocation5 + $0x2a0] sm:$0xff]
    %v144 = vld [vmem:[#allocation5 + $0x2a8] sm:$0xff]
    %v145 = vld [vmem:[#allocation5 + $0x2b0] sm:$0xff]
    %v146 = vld [vmem:[#allocation5 + $0x2b8] sm:$0xff]
    %v147 = vld [vmem:[#allocation5 + $0x2c0] sm:$0xff]
    %v148 = vld [vmem:[#allocation5 + $0x2c8] sm:$0xff]
    %v149 = vld [vmem:[#allocation5 + $0x2d0] sm:$0xff]
    %v150 = vld [vmem:[#allocation5 + $0x2d8] sm:$0xff]
    %v151 = vld [vmem:[#allocation5 + $0x2e0] sm:$0xff]
    %v152 = vld [vmem:[#allocation5 + $0x2e8] sm:$0xff]
    %v153 = vld [vmem:[#allocation5 + $0x2f0] sm:$0xff]
    %v154 = vld [vmem:[#allocation5 + $0x2f8] sm:$0xff]
    %v155 = vld [vmem:[#allocation5 + $0x300] sm:$0xff]
    %v156 = vld [vmem:[#allocation5 + $0x308] sm:$0xff]
    %v157 = vld [vmem:[#allocation5 + $0x310] sm:$0xff]
    %v158 = vld [vmem:[#allocation5 + $0x318] sm:$0xff]
    %v159 = vld [vmem:[#allocation7] sm:$0xff]
    %v160 = vld [vmem:[#allocation7 + $0x8] sm:$0x3]
    %v163 = vperm.slane %v159, 0
    %v164 = vperm.slane %v159, 1
    %v165 = vperm.slane %v159, 2
    %v166 = vperm.slane %v159, 3
    %v167 = vperm.slane %v159, 4
    %v168 = vperm.slane %v159, 5
    %v169 = vperm.slane %v159, 6
    %v170 = vperm.slane %v159, 7
    %v171 = vperm.slane %v160, 0
    %v172 = vperm.slane %v160, 1
    %vm183 = vcmask 654336
    %v185 = vsel %vm183, %v58, 0
    %187 = vmatpush.msra.mxu0 0.0
    %188 = vmatpush.msra.mxu0 0.0
    %189 = vmatpush.msra.mxu0 0.0
    %190 = vmatpush.msra.mxu0 0.0
    %191 = vmatpush.msra.mxu0 0.0
    %192 = vmatpush.msra.mxu0 0.0
    %193 = vmatpush.msra.mxu0 %v149
    %194 = vmatpush.msra.mxu0 %v139
    %195 = vmatpush.msra.mxu0 %v129
    %196 = vmatpush.msra.mxu0 %v119
    %197 = vmatpush.msra.mxu0 %v109
    %198 = vmatpush.msra.mxu0 %v99
    %199 = vmatpush.msra.mxu0 %v89
    %200 = vmatpush.msra.mxu0 %v79
    %201 = vmatpush.msra.mxu0 %v69
    %202 = vmatpush.msra.mxu0 %v59
    %203 = vmatmul.f32.gmra.mxu0 %v185
    %v204 = vpop.f32.mrf.mxu0
    %v205 = vadd.f32 %v163, %v204
    %206 = vdwg.mxu0
    %207 = vmatpush.msra.mxu0 0.0
    %208 = vmatpush.msra.mxu0 0.0
    %209 = vmatpush.msra.mxu0 0.0
    %210 = vmatpush.msra.mxu0 0.0
    %211 = vmatpush.msra.mxu0 0.0
    %212 = vmatpush.msra.mxu0 0.0
    %213 = vmatpush.msra.mxu0 %v150
    %214 = vmatpush.msra.mxu0 %v140
    %215 = vmatpush.msra.mxu0 %v130
    %216 = vmatpush.msra.mxu0 %v120
    %217 = vmatpush.msra.mxu0 %v110
    %218 = vmatpush.msra.mxu0 %v100
    %219 = vmatpush.msra.mxu0 %v90
    %220 = vmatpush.msra.mxu0 %v80
    %221 = vmatpush.msra.mxu0 %v70
    %222 = vmatpush.msra.mxu0 %v60
    %223 = vmatmul.f32.gmra.mxu0 %v185
    %v224 = vpop.f32.mrf.mxu0
    %v225 = vadd.f32 %v164, %v224
    %226 = vdwg.mxu0
    %227 = vmatpush.msra.mxu0 0.0
    %228 = vmatpush.msra.mxu0 0.0
    %229 = vmatpush.msra.mxu0 0.0
    %230 = vmatpush.msra.mxu0 0.0
    %231 = vmatpush.msra.mxu0 0.0
    %232 = vmatpush.msra.mxu0 0.0
    %233 = vmatpush.msra.mxu0 %v151
    %234 = vmatpush.msra.mxu0 %v141
    %235 = vmatpush.msra.mxu0 %v131
    %236 = vmatpush.msra.mxu0 %v121
    %237 = vmatpush.msra.mxu0 %v111
    %238 = vmatpush.msra.mxu0 %v101
    %239 = vmatpush.msra.mxu0 %v91
    %240 = vmatpush.msra.mxu0 %v81
    %241 = vmatpush.msra.mxu0 %v71
    %242 = vmatpush.msra.mxu0 %v61
    %243 = vmatmul.f32.gmra.mxu0 %v185
    %v244 = vpop.f32.mrf.mxu0
    %v245 = vadd.f32 %v165, %v244
    %246 = vdwg.mxu0
    %247 = vmatpush.msra.mxu0 0.0
    %248 = vmatpush.msra.mxu0 0.0
    %249 = vmatpush.msra.mxu0 0.0
    %250 = vmatpush.msra.mxu0 0.0
    %251 = vmatpush.msra.mxu0 0.0
    %252 = vmatpush.msra.mxu0 0.0
    %253 = vmatpush.msra.mxu0 %v152
    %254 = vmatpush.msra.mxu0 %v142
    %255 = vmatpush.msra.mxu0 %v132
    %256 = vmatpush.msra.mxu0 %v122
    %257 = vmatpush.msra.mxu0 %v112
    %258 = vmatpush.msra.mxu0 %v102
    %259 = vmatpush.msra.mxu0 %v92
    %260 = vmatpush.msra.mxu0 %v82
    %261 = vmatpush.msra.mxu0 %v72
    %262 = vmatpush.msra.mxu0 %v62
    %263 = vmatmul.f32.gmra.mxu0 %v185
    %v264 = vpop.f32.mrf.mxu0
    %v265 = vadd.f32 %v166, %v264
    %266 = vdwg.mxu0
    %267 = vmatpush.msra.mxu0 0.0
    %268 = vmatpush.msra.mxu0 0.0
    %269 = vmatpush.msra.mxu0 0.0
    %270 = vmatpush.msra.mxu0 0.0
    %271 = vmatpush.msra.mxu0 0.0
    %272 = vmatpush.msra.mxu0 0.0
    %273 = vmatpush.msra.mxu0 %v153
    %274 = vmatpush.msra.mxu0 %v143
    %275 = vmatpush.msra.mxu0 %v133
    %276 = vmatpush.msra.mxu0 %v123
    %277 = vmatpush.msra.mxu0 %v113
    %278 = vmatpush.msra.mxu0 %v103
    %279 = vmatpush.msra.mxu0 %v93
    %280 = vmatpush.msra.mxu0 %v83
    %281 = vmatpush.msra.mxu0 %v73
    %282 = vmatpush.msra.mxu0 %v63
    %283 = vmatmul.f32.gmra.mxu0 %v185
    %v284 = vpop.f32.mrf.mxu0
    %v285 = vadd.f32 %v167, %v284
    %286 = vdwg.mxu0
    %287 = vmatpush.msra.mxu0 0.0
    %288 = vmatpush.msra.mxu0 0.0
    %289 = vmatpush.msra.mxu0 0.0
    %290 = vmatpush.msra.mxu0 0.0
    %291 = vmatpush.msra.mxu0 0.0
    %292 = vmatpush.msra.mxu0 0.0
    %293 = vmatpush.msra.mxu0 %v154
    %294 = vmatpush.msra.mxu0 %v144
    %295 = vmatpush.msra.mxu0 %v134
    %296 = vmatpush.msra.mxu0 %v124
    %297 = vmatpush.msra.mxu0 %v114
    %298 = vmatpush.msra.mxu0 %v104
    %299 = vmatpush.msra.mxu0 %v94
    %300 = vmatpush.msra.mxu0 %v84
    %301 = vmatpush.msra.mxu0 %v74
    %302 = vmatpush.msra.mxu0 %v64
    %303 = vmatmul.f32.gmra.mxu0 %v185
    %v304 = vpop.f32.mrf.mxu0
    %v305 = vadd.f32 %v168, %v304
    %306 = vdwg.mxu0
    %307 = vmatpush.msra.mxu0 0.0
    %308 = vmatpush.msra.mxu0 0.0
    %309 = vmatpush.msra.mxu0 0.0
    %310 = vmatpush.msra.mxu0 0.0
    %311 = vmatpush.msra.mxu0 0.0
    %312 = vmatpush.msra.mxu0 0.0
    %313 = vmatpush.msra.mxu0 %v155
    %314 = vmatpush.msra.mxu0 %v145
    %315 = vmatpush.msra.mxu0 %v135
    %316 = vmatpush.msra.mxu0 %v125
    %317 = vmatpush.msra.mxu0 %v115
    %318 = vmatpush.msra.mxu0 %v105
    %319 = vmatpush.msra.mxu0 %v95
    %320 = vmatpush.msra.mxu0 %v85
    %321 = vmatpush.msra.mxu0 %v75
    %322 = vmatpush.msra.mxu0 %v65
    %323 = vmatmul.f32.gmra.mxu0 %v185
    %v324 = vpop.f32.mrf.mxu0
    %v325 = vadd.f32 %v169, %v324
    %326 = vdwg.mxu0
    %327 = vmatpush.msra.mxu0 0.0
    %328 = vmatpush.msra.mxu0 0.0
    %329 = vmatpush.msra.mxu0 0.0
    %330 = vmatpush.msra.mxu0 0.0
    %331 = vmatpush.msra.mxu0 0.0
    %332 = vmatpush.msra.mxu0 0.0
    %333 = vmatpush.msra.mxu0 %v156
    %334 = vmatpush.msra.mxu0 %v146
    %335 = vmatpush.msra.mxu0 %v136
    %336 = vmatpush.msra.mxu0 %v126
    %337 = vmatpush.msra.mxu0 %v116
    %338 = vmatpush.msra.mxu0 %v106
    %339 = vmatpush.msra.mxu0 %v96
    %340 = vmatpush.msra.mxu0 %v86
    %341 = vmatpush.msra.mxu0 %v76
    %342 = vmatpush.msra.mxu0 %v66
    %343 = vmatmul.f32.gmra.mxu0 %v185
    %v344 = vpop.f32.mrf.mxu0
    %v345 = vadd.f32 %v170, %v344
    %346 = vdwg.mxu0
    %347 = vmatpush.msra.mxu0 0.0
    %348 = vmatpush.msra.mxu0 0.0
    %349 = vmatpush.msra.mxu0 0.0
    %350 = vmatpush.msra.mxu0 0.0
    %351 = vmatpush.msra.mxu0 0.0
    %352 = vmatpush.msra.mxu0 0.0
    %353 = vmatpush.msra.mxu0 %v157
    %354 = vmatpush.msra.mxu0 %v147
    %355 = vmatpush.msra.mxu0 %v137
    %356 = vmatpush.msra.mxu0 %v127
    %357 = vmatpush.msra.mxu0 %v117
    %358 = vmatpush.msra.mxu0 %v107
    %359 = vmatpush.msra.mxu0 %v97
    %360 = vmatpush.msra.mxu0 %v87
    %361 = vmatpush.msra.mxu0 %v77
    %362 = vmatpush.msra.mxu0 %v67
    %363 = vmatmul.f32.gmra.mxu0 %v185
    %v364 = vpop.f32.mrf.mxu0
    %v365 = vadd.f32 %v171, %v364
    %366 = vdwg.mxu0
    %367 = vmatpush.msra.mxu0 0.0
    %368 = vmatpush.msra.mxu0 0.0
    %369 = vmatpush.msra.mxu0 0.0
    %370 = vmatpush.msra.mxu0 0.0
    %371 = vmatpush.msra.mxu0 0.0
    %372 = vmatpush.msra.mxu0 0.0
    %373 = vmatpush.msra.mxu0 %v158
    %374 = vmatpush.msra.mxu0 %v148
    %375 = vmatpush.msra.mxu0 %v138
    %376 = vmatpush.msra.mxu0 %v128
    %377 = vmatpush.msra.mxu0 %v118
    %378 = vmatpush.msra.mxu0 %v108
    %379 = vmatpush.msra.mxu0 %v98
    %380 = vmatpush.msra.mxu0 %v88
    %381 = vmatpush.msra.mxu0 %v78
    %382 = vmatpush.msra.mxu0 %v68
    %383 = vmatmul.f32.gmra.mxu0 %v185
    %v384 = vpop.f32.mrf.mxu0
    %v385 = vadd.f32 %v172, %v384
    %386 = vdwg.mxu0
    %v387 = vtanh.pop %v205
    %v388 = vtanh.pop %v225
    %v389 = vtanh.pop %v245
    %v390 = vtanh.pop %v265
    %v391 = vtanh.pop %v285
    %v392 = vtanh.pop %v305
    %v393 = vtanh.pop %v325
    %v394 = vtanh.pop %v345
    %v395 = vtanh.pop %v365
    %v396 = vtanh.pop %v385
    %v397 = vmul.f32 %v387, %v392
    %v398 = vmul.f32 %v388, %v393
    %v399 = vmul.f32 %v389, %v394
    %v400 = vmul.f32 %v390, %v395
    %v401 = vmul.f32 %v391, %v396
    %v402 = vadd.f32 %v397, %v398
    %v403 = vadd.f32 %v402, %v399
    %v404 = vadd.f32 %v403, %v400
    %v405 = vadd.f32 %v404, %v401
    %v406 = vtanh.pop %v405
    %vm407 = vcmask 523264
    %408 = vst.msk [vmem:[#allocation8] sm:$0xff] %vm407, %v406
    // Predicated region
    $region26: #{tpu_custom_call.1} parent=1 // pred_check
      _
    $region27: #{tpu_custom_call.1} parent=1 // pred_check_branch
      %410 = sbr.rel (0) target = $region29
    $region28: #{tpu_custom_call.1} parent=1 // pred_region
      %412 = vsyncadd [#allocation4], 0
      %s414 = sshll.u32 [#allocation8], 4
      %s415 = int_to_ptr.vmem [resolvable:$true] %s414
      %s416 = sshll.u32 %s3, 4
      %s417 = int_to_ptr.hbm [resolvable:$true] %s416
      %419 = dma.vmem_to_hbm [thread:$0]  %s415, 128, %s417, [#allocation4]
    $region29: #{tpu_custom_call.1} parent=1 // pred_fallthru
      _
    // Predicated region
    $region30: #{tpu_custom_call.1} parent=1 // pred_check
      _
    $region31: #{tpu_custom_call.1} parent=1 // pred_check_branch
      %421 = sbr.rel (0) target = $region33
    $region32: #{tpu_custom_call.1} parent=1 // pred_region
      %423 = dma.done [#allocation4], 128
    $region33: #{tpu_custom_call.1} parent=1 // pred_fallthru
      _
    %424 = vsyncpa [#allocation3], 1
    %425 = vsyncpa [#allocation6], 1
    %426 = vsyncpa [#allocation4], 1

</llo_original>
